<compile_context>
chip_gen: v6e
topology: v6e:2x2x1
jax: 0.10.0
libtpu: 0.0.40
codegen_flags: <defaults>
</compile_context>

<pallas_src>
import functools
import math

import jax
import jax.numpy as jnp
from jax.experimental import pallas as pl
from jax.experimental.pallas import tpu as pltpu


def _expanding_block_kernel(x_ref, w_ref, *rest, ct, use_bn, eps, inv_count):
    """One (batch, channel-tile) step.

    x_ref: (1, 4*Cin, HW)    four spatially shifted copies of x stacked on the reduction
                             axis (compute dtype); HW on lanes.
    w_ref: (1, 4*ct, 4*Cin)  stacked polyphase weights for this channel tile; rows are
                             parity-major (row = p*ct + j, parity p = 2*py + px).
    b_ref: (1, 4*ct, 1)      bias replicated over parities (present only if use_bn=False).
    o_ref: (1, 4*ct, HW)     parity-major output slab (out dtype), lane-dense store.
    """
    if use_bn:
        (o_ref,) = rest
    else:
        b_ref, o_ref = rest

    # Single stacked matmul on the MXU, f32 accumulation.
    y = jnp.dot(w_ref[0], x_ref[0], preferred_element_type=jnp.float32)   # (4*ct, HW)

    if use_bn:
        # InstanceNorm2d (affine=False): per-channel stats over all 4 parity planes
        # (= all 2H x 2W output pixels), computed in a single pass.  The conv bias is a
        # per-channel constant and is cancelled exactly by the mean subtraction -> skipped.
        row_sum = jnp.sum(y, axis=1, keepdims=True)                       # (4*ct, 1)
        row_sq = jnp.sum(y * y, axis=1, keepdims=True)                    # (4*ct, 1)
        ch_sum = (row_sum[0:ct] + row_sum[ct:2 * ct]
                  + row_sum[2 * ct:3 * ct] + row_sum[3 * ct:4 * ct])      # (ct, 1)
        ch_sq = (row_sq[0:ct] + row_sq[ct:2 * ct]
                 + row_sq[2 * ct:3 * ct] + row_sq[3 * ct:4 * ct])         # (ct, 1)
        mean = ch_sum * inv_count
        var = jnp.maximum(ch_sq * inv_count - mean * mean, 0.0)           # guard cancellation
        scale = jax.lax.rsqrt(var + eps)                                  # (ct, 1)
        shift = -mean * scale                                             # (ct, 1)
        scale4 = jnp.concatenate([scale, scale, scale, scale], axis=0)    # (4*ct, 1)
        shift4 = jnp.concatenate([shift, shift, shift, shift], axis=0)
        out = y * scale4 + shift4
    else:
        out = y + b_ref[0]

    # Fused ReLU + cast + one dense lane-major store of the whole slab.
    o_ref[0] = jnp.maximum(out, 0.0).astype(o_ref.dtype)


def _pick_channel_tile(cout, batch):
    """Channel tile ct: divisor of Cout, <= 128, with 4*ct sublane-friendly whenever the
    channel axis is split; prefer 4*ct a multiple of 128 (MXU / lane-store friendly)."""
    divisors = [d for d in range(1, cout + 1) if cout % d == 0]
    cands = [d for d in divisors if d <= 128 and (d == cout or (4 * d) % 8 == 0)]
    if not cands:
        cands = [cout]
    pref = [d for d in cands if (4 * d) % 128 == 0]
    ct = max(pref) if pref else max(cands)
    # Dual-TensorCore (v7x) friendliness: if there is a single batch item, try to split the
    # channel axis so the grid has >= 2 parallel work items.
    if batch == 1 and cout // ct < 2:
        split = [d for d in cands if d < ct and cout // d >= 2]
        if split:
            ct = max(split)
    return ct


def _polyphase_weights(weight, ct):
    """PyTorch ConvTranspose2d weight (Cin, Cout, 3, 3) -> stacked polyphase matrices
    (n_ct, 4*ct, 4*Cin).  Row p*ct + j of tile c is output channel c*ct + j at output
    parity p = 2*py + px; column t*Cin + ci is input tap t = 2*dy + dx."""
    cin, cout = weight.shape[0], weight.shape[1]

    def _k(parity, shift):
        if parity == 0:                       # even output row/col: only kernel index 1
            return 1 if shift == 0 else None
        return 2 if shift == 0 else 0         # odd: index 2 (same pixel) / 0 (next pixel)

    w_poly = jnp.zeros((4, cout, 4 * cin), jnp.float32)
    for py in (0, 1):
        for px in (0, 1):
            p = 2 * py + px
            for dy in (0, 1):
                for dx in (0, 1):
                    kh, kw = _k(py, dy), _k(px, dx)
                    if kh is None or kw is None:
                        continue
                    t = 2 * dy + dx
                    w_poly = w_poly.at[p, :, t * cin:(t + 1) * cin].set(
                        jnp.transpose(weight[:, :, kh, kw]))
    n_ct = cout // ct
    w_poly = w_poly.reshape(4, n_ct, ct, 4 * cin)
    return jnp.transpose(w_poly, (1, 0, 2, 3)).reshape(n_ct, 4 * ct, 4 * cin)


@functools.partial(jax.jit, static_argnames=("use_bn", "eps", "compute_dtype",
                                             "out_dtype", "channel_tile"))
def expanding_block(x, weight, bias, use_bn=True, eps=1e-5,
                    compute_dtype=jnp.bfloat16, out_dtype=None, channel_tile=None):
    """x: (N, Cin, H, W) NCHW; weight: (Cin, Cout, 3, 3) (PyTorch ConvTranspose2d layout);
    bias: (Cout,).  Returns (N, Cout, 2H, 2W) in out_dtype (default: x.dtype)."""
    N, Cin, H, W = x.shape
    Cout = weight.shape[1]
    Hout, Wout = 2 * H, 2 * W
    HW = H * W
    if out_dtype is None:
        out_dtype = x.dtype

    ct = _pick_channel_tile(Cout, N) if channel_tile is None else channel_tile
    assert Cout % ct == 0
    n_ct = Cout // ct

    # ---- input taps: four one-pixel-shifted, zero-padded copies of x (XLA prep) ----
    # Tap order t = 2*dy + dx for (dy, dx) in (0,0), (0,1), (1,0), (1,1).
    # TODO(synk): build the three shifted taps in-kernel (pltpu.roll + lane masks) so x is
    # DMA'd once instead of materializing 4*Cin*H*W in HBM; kept as XLA prep here for
    # lowering robustness.
    x_c = x.astype(compute_dtype)
    x_pad = jnp.pad(x_c, ((0, 0), (0, 0), (0, 1), (0, 1)))                # (N, Cin, H+1, W+1)
    taps = [x_pad[:, :, dy:dy + H, dx:dx + W] for dy in (0, 1) for dx in (0, 1)]
    xs = jnp.concatenate(taps, axis=1).reshape(N, 4 * Cin, HW)

    # ---- stacked polyphase weights (and bias, only when it is actually used) ----
    w_stacked = _polyphase_weights(weight, ct).astype(compute_dtype)      # (n_ct, 4*ct, 4*Cin)

    kernel = functools.partial(_expanding_block_kernel, ct=ct, use_bn=use_bn,
                               eps=float(eps), inv_count=1.0 / (4.0 * HW))

    in_specs = [
        pl.BlockSpec((1, 4 * Cin, HW), lambda n, c: (n, 0, 0)),           # resident over c
        pl.BlockSpec((1, 4 * ct, 4 * Cin), lambda n, c: (c, 0, 0)),
    ]
    operands = [xs, w_stacked]
    if not use_bn:
        b_stacked = jnp.broadcast_to(
            bias.astype(jnp.float32).reshape(n_ct, 1, ct, 1),
            (n_ct, 4, ct, 1)).reshape(n_ct, 4 * ct, 1)
        in_specs.append(pl.BlockSpec((1, 4 * ct, 1), lambda n, c: (c, 0, 0)))
        operands.append(b_stacked)

    # ---- VMEM budget derived from the actual (double-buffered) block sizes ----
    csize = jnp.dtype(compute_dtype).itemsize
    osize = jnp.dtype(out_dtype).itemsize
    block_bytes = (2 * (4 * Cin * HW) * csize            # x block
                   + 2 * (4 * ct * 4 * Cin) * csize      # weight block
                   + 2 * (4 * ct * HW) * osize           # output block
                   + 2 * (4 * ct * HW) * 4               # f32 matmul slab / fused temps
                   + (0 if use_bn else 2 * 4 * ct * 4))  # bias block
    try:
        vmem_cap = int(pltpu.get_tpu_info().vmem_capacity_bytes)
    except Exception:
        vmem_cap = 64 * 1024 * 1024                       # v7x floor
    vmem_limit = max(16 * 1024 * 1024,
                     min(block_bytes + 4 * 1024 * 1024, int(0.85 * vmem_cap)))
    # TODO(synk): for configs whose blocks exceed this budget (first binds on v7x's 64 MiB
    # VMEM), add an HW- or K-tile grid axis with a two-pass norm instead of only shrinking ct.

    out = pl.pallas_call(
        kernel,
        out_shape=jax.ShapeDtypeStruct((N, 4 * Cout, HW), out_dtype),
        grid_spec=pltpu.PrefetchScalarGridSpec(
            num_scalar_prefetch=0,
            grid=(N, n_ct),
            in_specs=in_specs,
            out_specs=pl.BlockSpec((1, 4 * ct, HW), lambda n, c: (n, c, 0)),
        ),
        compiler_params=pltpu.CompilerParams(
            dimension_semantics=("parallel", "parallel"),
            vmem_limit_bytes=vmem_limit,
        ),
    )(*operands)

    # ---- parity interleave back to NCHW ----
    # out[n, c*4*ct + (2*py+px)*ct + j, h*W + w] -> y[n, c*ct + j, 2*h + py, 2*w + px]
    # TODO(synk): this is one XLA transpose (an extra HBM round trip over the output); it can
    # be removed by emitting NCHW in-kernel (lane/sublane parity interleave) or by letting
    # the consumer accept the parity-major layout.
    y = out.reshape(N, n_ct, 2, 2, ct, H, W)
    y = jnp.transpose(y, (0, 1, 4, 5, 2, 6, 3))
    return y.reshape(N, Cout, Hout, Wout)


def expanding_block_reference(x, weight, bias, use_bn=True, eps=1e-5):
    """Independent pure-JAX reference (scatter-add formulation of conv_transpose)."""
    N, Cin, H, W = x.shape
    Cout = weight.shape[1]
    Hout, Wout = 2 * H, 2 * W
    y_full = jnp.zeros((N, Cout, 2 * H + 1, 2 * W + 1), jnp.float32)
    for kh in range(3):
        for kw in range(3):
            contrib = jnp.einsum('nchw,cd->ndhw', x, weight[:, :, kh, kw])
            y_full = y_full.at[:, :, kh:kh + 2 * H - 1:2, kw:kw + 2 * W - 1:2].add(contrib)
    y = y_full[:, :, 1:1 + Hout, 1:1 + Wout] + bias[None, :, None, None]
    if use_bn:
        mean = y.mean(axis=(2, 3), keepdims=True)
        var = ((y - mean) ** 2).mean(axis=(2, 3), keepdims=True)
        y = (y - mean) / jnp.sqrt(var + eps)
    return jnp.maximum(y, 0.0)


if __name__ == "__main__":
    key = jax.random.PRNGKey(0)
    N, Cin, H, W = 2, 4, 16, 16
    Cout = Cin // 2

    k1, k2, k3 = jax.random.split(key, 3)
    x = jax.random.normal(k1, (N, Cin, H, W), jnp.float32)
    # Deterministic, PyTorch-like uniform init for ConvTranspose2d params.
    bound = 1.0 / math.sqrt(Cin * 3 * 3)
    weight = jax.random.uniform(k2, (Cin, Cout, 3, 3), jnp.float32, -bound, bound)
    bias = jax.random.uniform(k3, (Cout,), jnp.float32, -bound, bound)

    ref = expanding_block_reference(x, weight, bias, use_bn=True)

    # f32 compute path: tight check against the independent reference.
    out_f32 = expanding_block(x, weight, bias, use_bn=True, compute_dtype=jnp.float32)
    out_f32 = jax.block_until_ready(out_f32)
    assert out_f32.shape == (N, Cout, 2 * H, 2 * W), out_f32.shape
    if not jnp.allclose(out_f32, ref, atol=1e-4, rtol=1e-4):
        raise AssertionError("f32 Pallas ExpandingBlock does not match reference")

    # Default bf16 MXU path (f32 output since out_dtype defaults to x.dtype).
    out_bf16 = expanding_block(x, weight, bias, use_bn=True)
    out_bf16 = jax.block_until_ready(out_bf16)
    if not jnp.allclose(out_bf16, ref, atol=3e-2, rtol=3e-2):
        raise AssertionError("bf16 Pallas ExpandingBlock does not match reference")

    # use_bn=False (conv bias + ReLU) path.
    ref_nobn = expanding_block_reference(x, weight, bias, use_bn=False)
    out_nobn = jax.block_until_ready(
        expanding_block(x, weight, bias, use_bn=False, compute_dtype=jnp.float32))
    if not jnp.allclose(out_nobn, ref_nobn, atol=1e-4, rtol=1e-4):
        raise AssertionError("use_bn=False Pallas ExpandingBlock does not match reference")

    print("KERNEL_OK")
</pallas_src>

<mosaic_0001>
module attributes {stable_mosaic.version = 11 : i64} {
  func.func @_expanding_block_kernel(%arg0: i32, %arg1: i32, %arg2: memref<1x16x256xf32, #tpu.memory_space<vmem>>, %arg3: memref<1x8x16xf32, #tpu.memory_space<vmem>>, %arg4: memref<1x8x256xf32, #tpu.memory_space<vmem>>) attributes {dimension_semantics = [#tpu.dimension_semantics<parallel>, #tpu.dimension_semantics<parallel>], iteration_bounds = array<i64: 2, 1>, scalar_prefetch = 0 : i64, scratch_operands = 0 : i64, tpu.core_type = #tpu.core_type<tc>, window_params = [{transform_indices = @transform_0, window_bounds = array<i64: 1, 16, 256>}, {transform_indices = @transform_1, window_bounds = array<i64: 1, 8, 16>}, {transform_indices = @transform_2, window_bounds = array<i64: 1, 8, 256>}]} {
    %c0 = arith.constant 0 : index
    %c0_0 = arith.constant 0 : index
    %c0_1 = arith.constant 0 : index
    %0 = vector.load %arg3[%c0, %c0_0, %c0_1] : memref<1x8x16xf32, #tpu.memory_space<vmem>>, vector<1x8x16xf32>
    %1 = vector.shape_cast %0 : vector<1x8x16xf32> to vector<8x16xf32>
    %c0_2 = arith.constant 0 : index
    %c0_3 = arith.constant 0 : index
    %c0_4 = arith.constant 0 : index
    %2 = vector.load %arg2[%c0_2, %c0_3, %c0_4] : memref<1x16x256xf32, #tpu.memory_space<vmem>>, vector<1x16x256xf32>
    %3 = vector.shape_cast %2 : vector<1x16x256xf32> to vector<16x256xf32>
    %cst = arith.constant dense<0.000000e+00> : vector<8x256xf32>
    %4 = tpu.matmul %1, %3, %cst {dimension_numbers = #tpu.dot_dimension_numbers<[1], [0], [0], [1], [0, 0, 1, 1], [], []>} : vector<8x16xf32>, vector<16x256xf32>, vector<8x256xf32> -> vector<8x256xf32>
    %cst_5 = arith.constant dense<0.000000e+00> : vector<8xf32>
    %5 = vector.multi_reduction <add>, %4, %cst_5 [1] : vector<8x256xf32> to vector<8xf32>
    %6 = vector.shape_cast %5 : vector<8xf32> to vector<8x1xf32>
    %7 = arith.mulf %4, %4 : vector<8x256xf32>
    %cst_6 = arith.constant dense<0.000000e+00> : vector<8xf32>
    %8 = vector.multi_reduction <add>, %7, %cst_6 [1] : vector<8x256xf32> to vector<8xf32>
    %9 = vector.shape_cast %8 : vector<8xf32> to vector<8x1xf32>
    %10 = vector.extract_strided_slice %6 {offsets = [0, 0], sizes = [2, 1], strides = [1, 1]} : vector<8x1xf32> to vector<2x1xf32>
    %11 = vector.extract_strided_slice %6 {offsets = [2, 0], sizes = [2, 1], strides = [1, 1]} : vector<8x1xf32> to vector<2x1xf32>
    %12 = arith.addf %10, %11 : vector<2x1xf32>
    %13 = vector.extract_strided_slice %6 {offsets = [4, 0], sizes = [2, 1], strides = [1, 1]} : vector<8x1xf32> to vector<2x1xf32>
    %14 = arith.addf %12, %13 : vector<2x1xf32>
    %15 = vector.extract_strided_slice %6 {offsets = [6, 0], sizes = [2, 1], strides = [1, 1]} : vector<8x1xf32> to vector<2x1xf32>
    %16 = arith.addf %14, %15 : vector<2x1xf32>
    %17 = vector.extract_strided_slice %9 {offsets = [0, 0], sizes = [2, 1], strides = [1, 1]} : vector<8x1xf32> to vector<2x1xf32>
    %18 = vector.extract_strided_slice %9 {offsets = [2, 0], sizes = [2, 1], strides = [1, 1]} : vector<8x1xf32> to vector<2x1xf32>
    %19 = arith.addf %17, %18 : vector<2x1xf32>
    %20 = vector.extract_strided_slice %9 {offsets = [4, 0], sizes = [2, 1], strides = [1, 1]} : vector<8x1xf32> to vector<2x1xf32>
    %21 = arith.addf %19, %20 : vector<2x1xf32>
    %22 = vector.extract_strided_slice %9 {offsets = [6, 0], sizes = [2, 1], strides = [1, 1]} : vector<8x1xf32> to vector<2x1xf32>
    %23 = arith.addf %21, %22 : vector<2x1xf32>
    %cst_7 = arith.constant 9.765625E-4 : f32
    %24 = vector.broadcast %cst_7 : f32 to vector<2x1xf32>
    %25 = arith.mulf %16, %24 : vector<2x1xf32>
    %cst_8 = arith.constant 9.765625E-4 : f32
    %26 = vector.broadcast %cst_8 : f32 to vector<2x1xf32>
    %27 = arith.mulf %23, %26 : vector<2x1xf32>
    %28 = arith.mulf %25, %25 : vector<2x1xf32>
    %29 = arith.subf %27, %28 : vector<2x1xf32>
    %cst_9 = arith.constant 0.000000e+00 : f32
    %30 = vector.broadcast %cst_9 : f32 to vector<2x1xf32>
    %31 = arith.maximumf %29, %30 : vector<2x1xf32>
    %cst_10 = arith.constant 9.99999974E-6 : f32
    %32 = vector.broadcast %cst_10 : f32 to vector<2x1xf32>
    %33 = arith.addf %31, %32 : vector<2x1xf32>
    %34 = math.rsqrt %33 : vector<2x1xf32>
    %cst_11 = arith.constant 0.000000e+00 : f32
    %35 = vector.broadcast %cst_11 : f32 to vector<2x1xf32>
    %36 = arith.subf %35, %25 : vector<2x1xf32>
    %37 = arith.mulf %36, %34 : vector<2x1xf32>
    %38 = tpu.concatenate %34, %34, %34, %34 in 0 : vector<2x1xf32>, vector<2x1xf32>, vector<2x1xf32>, vector<2x1xf32> -> vector<8x1xf32>
    %39 = tpu.concatenate %37, %37, %37, %37 in 0 : vector<2x1xf32>, vector<2x1xf32>, vector<2x1xf32>, vector<2x1xf32> -> vector<8x1xf32>
    %40 = vector.broadcast %38 : vector<8x1xf32> to vector<8x256xf32>
    %41 = arith.mulf %4, %40 : vector<8x256xf32>
    %42 = vector.broadcast %39 : vector<8x1xf32> to vector<8x256xf32>
    %43 = arith.addf %41, %42 : vector<8x256xf32>
    %cst_12 = arith.constant 0.000000e+00 : f32
    %44 = vector.broadcast %cst_12 : f32 to vector<8x256xf32>
    %45 = arith.maximumf %43, %44 : vector<8x256xf32>
    %c0_13 = arith.constant 0 : index
    %c0_14 = arith.constant 0 : index
    %c0_15 = arith.constant 0 : index
    %46 = vector.load %arg4[%c0_13, %c0_14, %c0_15] : memref<1x8x256xf32, #tpu.memory_space<vmem>>, vector<1x8x256xf32>
    %47 = vector.shape_cast %46 : vector<1x8x256xf32> to vector<8x256xf32>
    %48 = vector.shape_cast %45 : vector<8x256xf32> to vector<1x8x256xf32>
    tpu.vector_store %arg4[%c0_13, %c0_14, %c0_15], %48 {strides = array<i32>} : memref<1x8x256xf32, #tpu.memory_space<vmem>>, vector<1x8x256xf32>,
    return
  }
  func.func @transform_0(%arg0: i32, %arg1: i32) -> (i32, i32, i32) {
    %c0_i32 = arith.constant 0 : i32
    %c0_i32_0 = arith.constant 0 : i32
    %c0_i32_1 = arith.constant 0 : i32
    return %arg0, %c0_i32, %c0_i32_0 : i32, i32, i32
  }
  func.func @transform_1(%arg0: i32, %arg1: i32) -> (i32, i32, i32) {
    %c0_i32 = arith.constant 0 : i32
    %c0_i32_0 = arith.constant 0 : i32
    %c0_i32_1 = arith.constant 0 : i32
    return %arg1, %c0_i32, %c0_i32_0 : i32, i32, i32
  }
  func.func @transform_2(%arg0: i32, %arg1: i32) -> (i32, i32, i32) {
    %c0_i32 = arith.constant 0 : i32
    %c0_i32_0 = arith.constant 0 : i32
    return %arg0, %arg1, %c0_i32 : i32, i32, i32
  }
}

</mosaic_0001>

<llo_original>
// kernel: expanding_block.1
$region0: #{expanding_block.1}
  #allocation0 [shape = 'u32[]', space=smem, size = 0x4, offset = 0x4, fixed_abs, tag = 'smem constant byte address 0x4 - core index']
  #allocation1 [shape = 'u32[144,128]{1,0:T(1,128)}', space=vmem, size = 0x12000, scoped, tag = 'internal scratch']
  %s0 = inlined_call_operand.vmem [shape: f32[2,16,256], index: 0, kind: input, shape index: {}]
  %s1 = inlined_call_operand.vmem [shape: f32[1,8,16], index: 1, kind: input, shape index: {}]
  %s2 = inlined_call_operand.vmem [shape: f32[2,8,256], index: 2, kind: output, shape index: {}]
  %s3 = sld [smem:[#allocation0]]
  $region41: #{expanding_block.1} parent=0
    _
  %s5 = ssub.s32 1, %s3
  %s6 = scalar_select 0, %s5, %s3
  loop: start=0, step=1, limit=4
  $region2: #{expanding_block.1} parent=0 // loop_pre_header
    _
  $region3: #{expanding_block.1} parent=0 // loop_header
    %s8 = sphi 0, %s12
    %p9 = scmp.ge.s32.totalorder %s8, 4
    %s15 = sphi 0, %s27
    %s16 = sphi 0, %s23
    %s17 = sphi 0, %s15
    %s18 = sphi 0, %s16
    %s19 = sphi 0, %s17
    %s20 = sphi 0, %s18
    %s30 = sphi 0, %s32
    %s33 = sphi 0, %s30
    %s34 = sphi 0, %s33
    %s50 = sphi 0, %s34
    %s56 = sphi 0, %s58
    %s59 = sphi 0, %s56
    %s60 = sphi 0, %s59
    %s76 = sphi 0, %s60
    %s84 = sphi 0, %s86
    %s87 = sphi 0, %s84
    %s88 = sphi 0, %s87
    %s104 = sphi 0, %s88
  $region4: #{expanding_block.1} parent=0 // loop_header_branch
    %11 = sbr.rel (%p9) target = $region8
  $region5: #{expanding_block.1} parent=0 // loop_body
    %s13 = ssub.s32 %s8, 1
    %s14 = ssub.s32 %s8, 2
    %s21 = sadd.s32 1, %s16
    %p22 = scmp.ge.s32.totalorder %s21, 1
    %s23 = scalar_select %p22, 0, %s21
    %s24 = sadd.s32 1, %s15
    %s25 = scalar_select %p22, %s24, %s15
    %p26 = scmp.ge.s32.totalorder %s25, 2
    %s27 = scalar_select %p26, 0, %s25
    %s28 = ssub.s32 %s15, %s27
    %p29 = scmp.eq.s32.totalorder %s28, 0
    %s31 = sadd.s32 %s30, 1
    %s32 = scalar_select %p29, %s30, %s31
    %p35 = pneg %p29
    %p36 = scmp.eq.s32.totalorder %s8, 1
    %p37 = por %p35, %p36
    %p38 = scmp.ne.s32.totalorder %s30, %s33
    %p39 = scmp.eq.s32.totalorder %s8, 0
    %p40 = por %p38, %p39
    %p41 = scmp.ne.s32.totalorder %s30, %s33
    %p42 = scmp.eq.s32.totalorder %s13, 1
    %p43 = por %p41, %p42
    %p44 = scmp.ne.s32.totalorder %s33, %s34
    %p45 = scmp.eq.s32.totalorder %s13, 0
    %p46 = por %p44, %p45
    %p47 = scmp.ne.s32.totalorder %s33, %s34
    %p48 = scmp.eq.s32.totalorder %s14, 1
    %p49 = por %p47, %p48
    %p51 = scmp.ne.s32.totalorder %s34, %s50
    %p52 = scmp.eq.s32.totalorder %s14, 0
    %p53 = por %p51, %p52
    %s54 = ssub.s32 %s16, %s23
    %p55 = scmp.eq.s32.totalorder %s54, 0
    %s57 = sadd.s32 %s56, 1
    %s58 = scalar_select %p55, %s56, %s57
    %p61 = pneg %p55
    %p62 = scmp.eq.s32.totalorder %s8, 1
    %p63 = por %p61, %p62
    %p64 = scmp.ne.s32.totalorder %s56, %s59
    %p65 = scmp.eq.s32.totalorder %s8, 0
    %p66 = por %p64, %p65
    %p67 = scmp.ne.s32.totalorder %s56, %s59
    %p68 = scmp.eq.s32.totalorder %s13, 1
    %p69 = por %p67, %p68
    %p70 = scmp.ne.s32.totalorder %s59, %s60
    %p71 = scmp.eq.s32.totalorder %s13, 0
    %p72 = por %p70, %p71
    %p73 = scmp.ne.s32.totalorder %s59, %s60
    %p74 = scmp.eq.s32.totalorder %s14, 1
    %p75 = por %p73, %p74
    %p77 = scmp.ne.s32.totalorder %s60, %s76
    %p78 = scmp.eq.s32.totalorder %s14, 0
    %p79 = por %p77, %p78
    %s80 = ssub.s32 %s15, %s27
    %s81 = ssub.s32 %s16, %s23
    %s82 = sor.u32 %s80, %s81
    %p83 = scmp.eq.s32.totalorder %s82, 0
    %s85 = sadd.s32 %s84, 1
    %s86 = scalar_select %p83, %s84, %s85
    %p89 = pneg %p83
    %p90 = scmp.eq.s32.totalorder %s8, 1
    %p91 = por %p89, %p90
    %p92 = scmp.ne.s32.totalorder %s84, %s87
    %p93 = scmp.eq.s32.totalorder %s8, 0
    %p94 = por %p92, %p93
    %p95 = scmp.ne.s32.totalorder %s84, %s87
    %p96 = scmp.eq.s32.totalorder %s13, 1
    %p97 = por %p95, %p96
    %p98 = scmp.ne.s32.totalorder %s87, %s88
    %p99 = scmp.eq.s32.totalorder %s13, 0
    %p100 = por %p98, %p99
    %p101 = scmp.ne.s32.totalorder %s87, %s88
    %p102 = scmp.eq.s32.totalorder %s14, 1
    %p103 = por %p101, %p102
    %p105 = scmp.ne.s32.totalorder %s88, %s104
    %p106 = scmp.eq.s32.totalorder %s14, 0
    %p107 = por %p105, %p106
    %p108 = scmp.le.s32.totalorder 1, %s8
    %p109 = scmp.lt.s32.totalorder %s8, 3
    %p110 = pnand %p108, %p109
    %p111 = pneg %p110
    // Predicated region
    $region9: #{expanding_block.1} parent=5 // pred_check
      _
    $region10: #{expanding_block.1} parent=5 // pred_check_branch
      %113 = sbr.rel (%p110) target = $region12
    $region11: #{expanding_block.1} parent=5 // pred_region
      %s114 = ssub.s32 %s8, 1
      // Predicated region
      $region13: #{expanding_block.1} parent=11 // pred_check
        %p115 = pneg %p72
      $region14: #{expanding_block.1} parent=11 // pred_check_branch
        %117 = sbr.rel (%p115) target = $region16
      $region15: #{expanding_block.1} parent=11 // pred_region
        %p118 = scmp.lt.s32.totalorder %s18, 0
        %s119 = scalar_select %p118, %s18, 0
        %s120 = smul.addr %s119, 8
        %s121 = scalar_lea.vmem %s1, %s120
      $region16: #{expanding_block.1} parent=11 // pred_fallthru
        _
    $region12: #{expanding_block.1} parent=5 // pred_fallthru
      _
    %p122 = scmp.lt.s32.totalorder %s8, 2
    // Predicated region
    $region17: #{expanding_block.1} parent=5 // pred_check
      %p123 = pneg %p122
    $region18: #{expanding_block.1} parent=5 // pred_check_branch
      %125 = sbr.rel (%p123) target = $region20
    $region19: #{expanding_block.1} parent=5 // pred_region
      // Predicated region
      $region21: #{expanding_block.1} parent=19 // pred_check
        %p126 = pneg %p40
      $region22: #{expanding_block.1} parent=19 // pred_check_branch
        %128 = sbr.rel (%p126) target = $region24
      $region23: #{expanding_block.1} parent=19 // pred_region
        %p129 = scmp.lt.s32.totalorder %s15, 1
        %s130 = scalar_select %p129, %s15, 1
        %s131 = smul.addr %s130, 4
        %s132 = smul.addr %s131, 8
        %s133 = scalar_lea.vmem %s0, %s132
      $region24: #{expanding_block.1} parent=19 // pred_fallthru
        _
    $region20: #{expanding_block.1} parent=5 // pred_fallthru
      _
    %p134 = scmp.le.s32.totalorder 1, %s8
    %p135 = scmp.lt.s32.totalorder %s8, 3
    %p136 = pnand %p134, %p135
    %p137 = pneg %p136
    // Predicated region
    $region25: #{expanding_block.1} parent=5 // pred_check
      _
    $region26: #{expanding_block.1} parent=5 // pred_check_branch
      %139 = sbr.rel (%p136) target = $region28
    $region27: #{expanding_block.1} parent=5 // pred_region
      %s140 = ssub.s32 %s8, 1
      %p141 = scmp.lt.s32.totalorder %s17, 1
      %s142 = scalar_select %p141, %s17, 1
      %s143 = smul.addr %s142, 4
      %s144 = smul.addr %s143, 8
      %s145 = scalar_lea.vmem %s0, %s144
      %p146 = pneg %p46
      %p147 = pneg %p43
      %p148 = scmp.lt.s32.totalorder %s18, 0
      %s149 = scalar_select %p148, %s18, 0
      %s150 = smul.addr %s149, 8
      %s151 = scalar_lea.vmem %s1, %s150
      %p152 = pneg %p72
      %p153 = pneg %p69
      %p154 = pneg %p100
      %p155 = pneg %p97
      %p156 = scmp.lt.s32.totalorder %s17, 1
      %s157 = scalar_select %p156, %s17, 1
      %p158 = scmp.lt.s32.totalorder %s18, 0
      %s159 = scalar_select %p158, %s18, 0
      %s160 = smul.addr %s159, 2
      %s161 = smul.addr %s157, 2
      %s162 = sadd.s32 %s160, %s161
      %s163 = smul.addr %s162, 8
      %s164 = scalar_lea.vmem %s2, %s163
      %p165 = scmp.lt.s32.totalorder %s17, 1
      %s166 = scalar_select %p165, %s17, 1
      %s167 = smul.addr %s166, 4
      %s168 = smul.addr %s167, 8
      %s169 = scalar_lea.vmem %s0, %s168
      %p170 = scmp.lt.s32.totalorder %s18, 0
      %s171 = scalar_select %p170, %s18, 0
      %s172 = smul.addr %s171, 8
      %s173 = scalar_lea.vmem %s1, %s172
      %p174 = scmp.lt.s32.totalorder %s17, 1
      %s175 = scalar_select %p174, %s17, 1
      %p176 = scmp.lt.s32.totalorder %s18, 0
      %s177 = scalar_select %p176, %s18, 0
      %s178 = smul.addr %s177, 2
      %s179 = smul.addr %s175, 2
      %s180 = sadd.s32 %s178, %s179
      %s181 = smul.addr %s180, 8
      %s182 = scalar_lea.vmem %s2, %s181
      %v183 = vld [vmem:[%s173] sm:$0xff]
      %v184 = vld [vmem:[%s169] sm:$0xff]
      %v185 = vld [vmem:[%s169 + $0x8] sm:$0xff]
      %v186 = vld [vmem:[%s169 + $0x10] sm:$0xff]
      %v187 = vld [vmem:[%s169 + $0x18] sm:$0xff]
      %vm188 = vcmask 130048
      %v190 = vsel %vm188, %v183, 0
      %192 = vmatprep.subr.mxu0 0.0
      %193 = vmatpush1.msra.mxu0 0.0
      %194 = vmatprep.subr.mxu0 0.0
      %195 = vmatpush1.msra.mxu0 0.0
      %196 = vmatprep.subr.mxu0 0.0
      %197 = vmatpush1.msra.mxu0 0.0
      %198 = vmatprep.subr.mxu0 0.0
      %199 = vmatpush1.msra.mxu0 0.0
      %200 = vmatprep.subr.mxu0 0.0
      %201 = vmatpush1.msra.mxu0 0.0
      %202 = vmatprep.subr.mxu0 0.0
      %203 = vmatpush1.msra.mxu0 0.0
      %204 = vmatprep.subr.mxu0 0.0
      %205 = vmatpush1.msra.mxu0 0.0
      %206 = vmatprep.subr.mxu0 0.0
      %207 = vmatpush1.msra.mxu0 0.0
      %208 = vmatprep.subr.mxu0 0.0
      %209 = vmatpush1.msra.mxu0 0.0
      %210 = vmatprep.subr.mxu0 0.0
      %211 = vmatpush1.msra.mxu0 0.0
      %212 = vmatprep.subr.mxu0 0.0
      %213 = vmatpush1.msra.mxu0 0.0
      %214 = vmatprep.subr.mxu0 0.0
      %215 = vmatpush1.msra.mxu0 0.0
      %216 = vmatprep.subr.mxu0 0.0
      %217 = vmatpush1.msra.mxu0 0.0
      %218 = vmatprep.subr.mxu0 0.0
      %219 = vmatpush1.msra.mxu0 0.0
      %220 = vmatprep.subr.mxu0 %v187
      %221 = vmatpush1.msra.mxu0 %v186
      %222 = vmatprep.subr.mxu0 %v185
      %223 = vmatpush1.msra.mxu0 %v184
      %224 = vmatprep.subr.mxu0 0.0
      %225 = vmatpush2.msra.mxu0 0.0
      %226 = vmatprep.subr.mxu0 0.0
      %227 = vmatpush2.msra.mxu0 0.0
      %228 = vmatprep.subr.mxu0 0.0
      %229 = vmatpush2.msra.mxu0 0.0
      %230 = vmatprep.subr.mxu0 0.0
      %231 = vmatpush2.msra.mxu0 0.0
      %232 = vmatprep.subr.mxu0 0.0
      %233 = vmatpush2.msra.mxu0 0.0
      %234 = vmatprep.subr.mxu0 0.0
      %235 = vmatpush2.msra.mxu0 0.0
      %236 = vmatprep.subr.mxu0 0.0
      %237 = vmatpush2.msra.mxu0 0.0
      %238 = vmatprep.subr.mxu0 0.0
      %239 = vmatpush2.msra.mxu0 0.0
      %240 = vmatprep.subr.mxu0 0.0
      %241 = vmatpush2.msra.mxu0 0.0
      %242 = vmatprep.subr.mxu0 0.0
      %243 = vmatpush2.msra.mxu0 0.0
      %244 = vmatprep.subr.mxu0 0.0
      %245 = vmatpush2.msra.mxu0 0.0
      %246 = vmatprep.subr.mxu0 0.0
      %247 = vmatpush2.msra.mxu0 0.0
      %248 = vmatprep.subr.mxu0 0.0
      %249 = vmatpush2.msra.mxu0 0.0
      %250 = vmatprep.subr.mxu0 0.0
      %251 = vmatpush2.msra.mxu0 0.0
      %252 = vmatprep.subr.mxu0 0.0
      %253 = vmatpush2.msra.mxu0 0.0
      %254 = vmatprep.subr.mxu0 0.0
      %255 = vmatpush2.msra.mxu0 0.0
      %256 = vmatprep.mubr.f32.mxu0 0.0
      %257 = vmatmul.mubr.f32.gmra.mxu0 %v190
      %v258 = vpop.f32.mrf.mxu0
      %v259 = vadd.f32 0.0, %v258
      %v260 = vpop.f32.mrf.mxu0
      %v261 = vadd.f32 0.0, %v260
      %262 = vdwg.mxu0
      %v263 = vadd.f32 %v259, %v261
      %264 = vadd.xlane.f32.xlu0 %v263
      %v265 = vpop.xlane.xlu0 %264
      %v266 = vmul.f32 %v259, %v259
      %v267 = vmul.f32 %v261, %v261
      %v268 = vadd.f32 %v266, %v267
      %269 = vadd.xlane.f32.xlu0 %v268
      %v270 = vpop.xlane.xlu0 %269
      %v272 = vrot.slane %v265, 2
      %v274 = vadd.f32 %v265, %v272
      %v275 = vrot.slane %v265, 4
      %v277 = vadd.f32 %v274, %v275
      %v278 = vrot.slane %v265, 6
      %v280 = vadd.f32 %v277, %v278
      %v282 = vrot.slane %v270, 2
      %v284 = vadd.f32 %v270, %v282
      %v285 = vrot.slane %v270, 4
      %v287 = vadd.f32 %v284, %v285
      %v288 = vrot.slane %v270, 6
      %v290 = vadd.f32 %v287, %v288
      %v291 = vmul.f32 %v280, 0.0009765625
      %v292 = vmul.f32 %v290, 0.0009765625
      %v293 = vmul.f32 %v291, %v291
      %v294 = vsub.f32 %v292, %v293
      %v295 = vmax.f32 %v294, 0.0
      %v296 = vadd.f32 %v295, 1e-05
      %v297 = vrsqrt.pop %v296
      %v298 = vsub.f32 0.0, %v291
      %v299 = vmul.f32 %v298, %v297
      %v301 = vrot.slane %v297, 6
      %v303 = vrot.slane %v297, 4
      %v305 = vrot.slane %v297, 2
      %vm307 = vcmask 1041408
      %v308 = vsel %vm307, %v297, %v301
      %vm309 = vcmask 1043456
      %v310 = vsel %vm309, %v308, %v303
      %vm311 = vcmask 1045504
      %v312 = vsel %vm311, %v310, %v305
      %v314 = vrot.slane %v299, 6
      %v316 = vrot.slane %v299, 4
      %v318 = vrot.slane %v299, 2
      %v320 = vsel %vm307, %v299, %v314
      %v321 = vsel %vm309, %v320, %v316
      %v322 = vsel %vm311, %v321, %v318
      %324 = vset.pattern.permute.xlu0 0
      %325 = vperm.xlu0 %324, %v312
      %v326 = vpop.permute.xlu0 %325
      %v328 = vmul.f32 %v259, %v326
      %v329 = vmul.f32 %v261, %v326
      %331 = vset.pattern.permute.xlu0 0
      %332 = vperm.xlu0 %331, %v322
      %v333 = vpop.permute.xlu0 %332
      %v335 = vadd.f32 %v328, %v333
      %v336 = vadd.f32 %v329, %v333
      %v337 = vmax.f32 %v335, 0.0
      %v338 = vmax.f32 %v336, 0.0
      %339 = vst [vmem:[%s182] sm:$0xff] %v337
      %340 = vst [vmem:[%s182 + $0x8] sm:$0xff] %v338
      %p341 = scmp.lt.s32.totalorder %s17, 1
      %s342 = scalar_select %p341, %s17, 1
      %p343 = scmp.lt.s32.totalorder %s18, 0
      %s344 = scalar_select %p343, %s18, 0
      %s345 = smul.addr %s344, 2
      %s346 = smul.addr %s342, 2
      %s347 = sadd.s32 %s345, %s346
      %s348 = smul.addr %s347, 8
      %s349 = scalar_lea.vmem %s2, %s348
      // Predicated region
      $region29: #{expanding_block.1} parent=27 // pred_check
        %p350 = pneg %p97
      $region30: #{expanding_block.1} parent=27 // pred_check_branch
        %352 = sbr.rel (%p350) target = $region32
      $region31: #{expanding_block.1} parent=27 // pred_region
        _
      $region32: #{expanding_block.1} parent=27 // pred_fallthru
        _
    $region28: #{expanding_block.1} parent=5 // pred_fallthru
      _
    %p353 = scmp.le.s32.totalorder 2, %s8
    // Predicated region
    $region33: #{expanding_block.1} parent=5 // pred_check
      %p354 = pneg %p353
    $region34: #{expanding_block.1} parent=5 // pred_check_branch
      %356 = sbr.rel (%p354) target = $region36
    $region35: #{expanding_block.1} parent=5 // pred_region
      %s357 = ssub.s32 %s8, 2
      // Predicated region
      $region37: #{expanding_block.1} parent=35 // pred_check
        %p358 = pneg %p103
      $region38: #{expanding_block.1} parent=35 // pred_check_branch
        %360 = sbr.rel (%p358) target = $region40
      $region39: #{expanding_block.1} parent=35 // pred_region
        %p361 = scmp.lt.s32.totalorder %s19, 1
        %s362 = scalar_select %p361, %s19, 1
        %p363 = scmp.lt.s32.totalorder %s20, 0
        %s364 = scalar_select %p363, %s20, 0
        %s365 = smul.addr %s364, 2
        %s366 = smul.addr %s362, 2
        %s367 = sadd.s32 %s365, %s366
        %s368 = smul.addr %s367, 8
        %s369 = scalar_lea.vmem %s2, %s368
      $region40: #{expanding_block.1} parent=35 // pred_fallthru
        _
    $region36: #{expanding_block.1} parent=5 // pred_fallthru
      _
  $region6: #{expanding_block.1} parent=0 // loop_footer
    %s12 = sadd.s32 1, %s8
  $region7: #{expanding_block.1} parent=0 // loop_footer_branch
    %7 = sbr.rel target = $region3
  $region8: #{expanding_block.1} parent=0 // loop_exit
    _

</llo_original>
